<compile_context>
chip_gen: v6e
topology: v6e:2x2x1
jax: 0.10.0
libtpu: 0.0.40
codegen_flags: <defaults>
</compile_context>

<pallas_src>
import functools

import jax
import jax.numpy as jnp
from jax.experimental import pallas as pl
from jax.experimental.pallas import tpu as pltpu

_LANE = 128


def _round_up(x, m):
    return ((x + m - 1) // m) * m


def _tpu_caps():
    """Best-effort (vmem_capacity_bytes, tensorcores_per_chip).

    Conservative defaults (64 MiB / 1 TC) if introspection is unavailable, so
    the derived limits are always <= physical VMEM on every generation.
    """
    vmem_cap = 64 * 1024 * 1024
    num_tc = 1
    try:
        info = pltpu.get_tpu_info()
        for name in ("vmem_capacity_bytes", "vmem_bytes", "vmem_size_bytes"):
            v = getattr(info, name, None)
            if v:
                vmem_cap = int(v)
                break
        for name in ("num_cores", "num_tensorcores", "tensorcores_per_chip",
                     "cores_per_chip"):
            v = getattr(info, name, None)
            if v:
                num_tc = int(v)
                break
    except Exception:
        pass
    try:
        kind = jax.devices()[0].device_kind.lower()
        if "v7" in kind or "tpu7" in kind:
            num_tc = max(num_tc, 2)
    except Exception:
        pass
    return vmem_cap, num_tc


def _se_kernel(x_ref, w1_ref, w2_ref, o_ref, *, inv_hw):
    # x_ref:  (Bt, C, HWp)  batch block, spatial flattened (zero-padded to HWp)
    # w1_ref: (C, Cr)       first Linear (no bias), stored (in, out)
    # w2_ref: (Cr, C)       second Linear (no bias), stored (in, out)

    # squeeze: spatial mean; accumulate in f32 (zero-padding keeps the sum
    # exact, divide by the *true* HW).
    y = jnp.sum(x_ref[...].astype(jnp.float32), axis=-1) * inv_hw        # (Bt, C)

    # excitation MLP: FC -> ReLU -> FC -> sigmoid (f32 accumulators, operands
    # in the weight dtype so bf16 weights take the native MXU path).
    h = jnp.maximum(
        jnp.dot(y.astype(w1_ref.dtype), w1_ref[...],
                preferred_element_type=jnp.float32), 0.0)                # (Bt, Cr)
    s = jax.nn.sigmoid(
        jnp.dot(h.astype(w2_ref.dtype), w2_ref[...],
                preferred_element_type=jnp.float32))                     # (Bt, C)

    # excite: per-channel gate broadcast over spatial.  Re-read the tile here
    # (don't keep a multi-MiB value live across the whole kernel) and multiply
    # in the native dtype (no f32 copy of x, lighter VALU on v5e for bf16).
    o_ref[...] = x_ref[...] * s.astype(o_ref.dtype)[:, :, None]          # (Bt, C, HWp)


def _spec(shape, index_map, buffers=None):
    """BlockSpec with optional pipeline buffer count (graceful fallback)."""
    if buffers is not None:
        try:
            return pl.BlockSpec(shape, index_map,
                                pipeline_mode=pl.Buffered(buffers))
        except TypeError:  # older jax without pipeline_mode kwarg
            pass
    return pl.BlockSpec(shape, index_map)


def se_layer(x, w1, w2, *, target_block_bytes=None, vmem_limit_bytes=None):
    """x: (B, C, H, W).  w1: (C, C//r).  w2: (C//r, C)."""
    B, C, H, W = x.shape
    HW = H * W
    Cr = w1.shape[1]

    vmem_cap, num_tc = _tpu_caps()

    # Lane-dense layout: pad spatial up to a multiple of 128.  Zero padding
    # keeps the spatial *sum* exact; the kernel divides by the true HW, and
    # padded lanes are sliced off after the call.
    HW_pad = _round_up(HW, _LANE)
    x_flat = x.reshape(B, C, HW)
    if HW_pad != HW:
        x_flat = jnp.pad(x_flat, ((0, 0), (0, 0), (0, HW_pad - HW)))

    itemsize = jnp.dtype(x.dtype).itemsize
    w_itemsize = jnp.dtype(w1.dtype).itemsize
    per_batch_bytes = C * HW_pad * itemsize
    w_bytes = 2 * C * Cr * w_itemsize          # single-buffered weights

    # Per-step block target: bigger on v7x (3.2 TB/s makes small steps
    # overhead-dominated), 4 MiB elsewhere — both sit on the measured
    # mem-bound roofline plateau.
    if target_block_bytes is None:
        target_block_bytes = (8 if num_tc >= 2 else 4) * 1024 * 1024

    # VMEM budget: 2x double-buffered input + 2x double-buffered output block
    # + weights, under physical capacity with headroom (v7x only has 64 MiB).
    headroom = 16 * 1024 * 1024
    budget = max(vmem_cap - headroom, 8 * 1024 * 1024)
    max_block_bytes = max(per_batch_bytes, (budget - w_bytes - (1 << 20)) // 4)

    bt = int(max(1, min(B,
                        target_block_bytes // max(per_batch_bytes, 1),
                        max_block_bytes // max(per_batch_bytes, 1))))
    grid_b = pl.cdiv(B, bt)

    # Megacore balance: only split / round the grid on multi-TC chips (v7x).
    # On single-TC v5e/v6e an extra grid step is pure per-step overhead.
    if num_tc > 1 and B > 1:
        if grid_b == 1:
            bt = pl.cdiv(B, num_tc)
            grid_b = pl.cdiv(B, bt)
        if grid_b % num_tc != 0:
            for cand in range(bt, 0, -1):
                if pl.cdiv(B, cand) % num_tc == 0:
                    bt = cand
                    grid_b = pl.cdiv(B, bt)
                    break

    block_bytes = bt * per_batch_bytes
    needed = 4 * block_bytes + w_bytes + (1 << 20)
    if vmem_limit_bytes is None:
        # Generation-aware cap: never request more than physical minus headroom.
        ceiling = max(32 * 1024 * 1024, vmem_cap - headroom)
        vmem_limit_bytes = int(min(max(needed, 32 * 1024 * 1024), ceiling))

    # Advisory cost: this call is HBM-bandwidth dominated (2x stream of x).
    cost = pl.CostEstimate(
        flops=4 * B * C * Cr + B * C * HW_pad,
        transcendentals=B * C,
        bytes_accessed=2 * B * C * HW_pad * itemsize + w_bytes,
    )

    out = pl.pallas_call(
        functools.partial(_se_kernel, inv_hw=1.0 / HW),
        out_shape=jax.ShapeDtypeStruct((B, C, HW_pad), x.dtype),
        grid_spec=pltpu.PrefetchScalarGridSpec(
            num_scalar_prefetch=0,
            grid=(grid_b,),
            in_specs=[
                pl.BlockSpec((bt, C, HW_pad), lambda b: (b, 0, 0)),
                _spec((C, Cr), lambda b: (0, 0), buffers=1),
                _spec((Cr, C), lambda b: (0, 0), buffers=1),
            ],
            out_specs=pl.BlockSpec((bt, C, HW_pad), lambda b: (b, 0, 0)),
        ),
        compiler_params=pltpu.CompilerParams(
            dimension_semantics=("parallel",),
            vmem_limit_bytes=vmem_limit_bytes),
        cost_estimate=cost,
    )(x_flat, w1, w2)

    if HW_pad != HW:
        out = out[:, :, :HW]
    return out.reshape(B, C, H, W)


def se_layer_ref(x, w1, w2):
    """Pure-JAX reference matching the PyTorch forward."""
    y = jnp.mean(x, axis=(2, 3))                 # (B, C)
    h = jnp.maximum(y @ w1, 0.0)                 # (B, Cr)
    s = jax.nn.sigmoid(h @ w2)                   # (B, C)
    return x * s[:, :, None, None]


if __name__ == "__main__":
    key = jax.random.PRNGKey(0)
    kx, k1, k2, kx2 = jax.random.split(key, 4)

    # Case 1: base shapes (HW = 256, already lane-aligned).
    B, C, H, W = 2, 4, 16, 16
    reduction = 2
    Cr = C // reduction

    x = jax.random.normal(kx, (B, C, H, W), dtype=jnp.float32)
    # PyTorch Linear stores (out, in); we store transposed (in, out) so the
    # kernel computes y @ W directly.  Both Linears are bias-free per the spec.
    w1 = jax.random.normal(k1, (C, Cr), dtype=jnp.float32) * 0.1
    w2 = jax.random.normal(k2, (Cr, C), dtype=jnp.float32) * 0.1

    out = jax.block_until_ready(se_layer(x, w1, w2))
    ref = se_layer_ref(x, w1, w2)
    assert out.shape == (B, C, H, W)
    assert jnp.allclose(out, ref, atol=1e-5, rtol=1e-5), "f32 mismatch vs reference"

    # Case 2: non-lane-aligned spatial (HW = 49) exercises the pad/slice path
    # and a ragged batch grid.
    x2 = jax.random.normal(kx2, (3, C, 7, 7), dtype=jnp.float32)
    out2 = jax.block_until_ready(se_layer(x2, w1, w2))
    ref2 = se_layer_ref(x2, w1, w2)
    assert jnp.allclose(out2, ref2, atol=1e-5, rtol=1e-5), "padded-HW mismatch"

    # Case 3: bf16 parity (loose tolerance — gate is cast to bf16 before the
    # excite multiply, matmuls accumulate in f32).
    xb = x.astype(jnp.bfloat16)
    w1b, w2b = w1.astype(jnp.bfloat16), w2.astype(jnp.bfloat16)
    outb = jax.block_until_ready(se_layer(xb, w1b, w2b))
    refb = se_layer_ref(xb.astype(jnp.float32), w1b.astype(jnp.float32),
                        w2b.astype(jnp.float32))
    assert jnp.allclose(outb.astype(jnp.float32), refb, atol=2e-2, rtol=2e-2), \
        "bf16 mismatch vs reference"

    print("KERNEL_OK")
</pallas_src>

<mosaic_0001>
module attributes {stable_mosaic.version = 11 : i64} {
  func.func @_se_kernel(%arg0: i32, %arg1: memref<2x4x256xf32, #tpu.memory_space<vmem>>, %arg2: memref<4x2xf32, #tpu.memory_space<vmem>>, %arg3: memref<2x4xf32, #tpu.memory_space<vmem>>, %arg4: memref<2x4x256xf32, #tpu.memory_space<vmem>>) attributes {dimension_semantics = [#tpu.dimension_semantics<parallel>], iteration_bounds = array<i64: 1>, scalar_prefetch = 0 : i64, scratch_operands = 0 : i64, tpu.core_type = #tpu.core_type<tc>, window_params = [{transform_indices = @transform_0, window_bounds = array<i64: 2, 4, 256>}, {pipeline_mode = #tpu.pipeline_mode<synchronous>, transform_indices = @transform_1, window_bounds = array<i64: 4, 2>}, {pipeline_mode = #tpu.pipeline_mode<synchronous>, transform_indices = @transform_2, window_bounds = array<i64: 2, 4>}, {transform_indices = @transform_3, window_bounds = array<i64: 2, 4, 256>}]} {
    %c0 = arith.constant 0 : index
    %c0_0 = arith.constant 0 : index
    %c0_1 = arith.constant 0 : index
    %0 = vector.load %arg1[%c0, %c0_0, %c0_1] : memref<2x4x256xf32, #tpu.memory_space<vmem>>, vector<2x4x256xf32>
    %cst = arith.constant dense<0.000000e+00> : vector<2x4xf32>
    %1 = vector.multi_reduction <add>, %0, %cst [2] : vector<2x4x256xf32> to vector<2x4xf32>
    %cst_2 = arith.constant 3.906250e-03 : f32
    %2 = vector.broadcast %cst_2 : f32 to vector<2x4xf32>
    %3 = arith.mulf %1, %2 : vector<2x4xf32>
    %c0_3 = arith.constant 0 : index
    %c0_4 = arith.constant 0 : index
    %4 = vector.load %arg2[%c0_3, %c0_4] : memref<4x2xf32, #tpu.memory_space<vmem>>, vector<4x2xf32>
    %cst_5 = arith.constant dense<0.000000e+00> : vector<2x2xf32>
    %5 = tpu.matmul %3, %4, %cst_5 {dimension_numbers = #tpu.dot_dimension_numbers<[1], [0], [0], [1], [0, 0, 1, 1], [], []>} : vector<2x4xf32>, vector<4x2xf32>, vector<2x2xf32> -> vector<2x2xf32>
    %cst_6 = arith.constant 0.000000e+00 : f32
    %6 = vector.broadcast %cst_6 : f32 to vector<2x2xf32>
    %7 = arith.maximumf %5, %6 : vector<2x2xf32>
    %c0_7 = arith.constant 0 : index
    %c0_8 = arith.constant 0 : index
    %8 = vector.load %arg3[%c0_7, %c0_8] : memref<2x4xf32, #tpu.memory_space<vmem>>, vector<2x4xf32>
    %cst_9 = arith.constant dense<0.000000e+00> : vector<2x4xf32>
    %9 = tpu.matmul %7, %8, %cst_9 {dimension_numbers = #tpu.dot_dimension_numbers<[1], [0], [0], [1], [0, 0, 1, 1], [], []>} : vector<2x2xf32>, vector<2x4xf32>, vector<2x4xf32> -> vector<2x4xf32>
    %10 = arith.negf %9 : vector<2x4xf32>
    %11 = math.exp %10 : vector<2x4xf32>
    %cst_10 = arith.constant 1.000000e+00 : f32
    %12 = vector.broadcast %cst_10 : f32 to vector<2x4xf32>
    %13 = arith.addf %12, %11 : vector<2x4xf32>
    %14 = arith.divf %12, %13 : vector<2x4xf32>
    %c0_11 = arith.constant 0 : index
    %c0_12 = arith.constant 0 : index
    %c0_13 = arith.constant 0 : index
    %15 = vector.load %arg1[%c0_11, %c0_12, %c0_13] : memref<2x4x256xf32, #tpu.memory_space<vmem>>, vector<2x4x256xf32>
    %16 = vector.shape_cast %14 : vector<2x4xf32> to vector<2x4x1xf32>
    %17 = vector.broadcast %16 : vector<2x4x1xf32> to vector<2x4x256xf32>
    %18 = arith.mulf %15, %17 : vector<2x4x256xf32>
    %c0_14 = arith.constant 0 : index
    %c0_15 = arith.constant 0 : index
    %c0_16 = arith.constant 0 : index
    %19 = vector.load %arg4[%c0_14, %c0_15, %c0_16] : memref<2x4x256xf32, #tpu.memory_space<vmem>>, vector<2x4x256xf32>
    tpu.vector_store %arg4[%c0_14, %c0_15, %c0_16], %18 {strides = array<i32>} : memref<2x4x256xf32, #tpu.memory_space<vmem>>, vector<2x4x256xf32>,
    return
  }
  func.func @transform_0(%arg0: i32) -> (i32, i32, i32) {
    %c0_i32 = arith.constant 0 : i32
    %c0_i32_0 = arith.constant 0 : i32
    %c0_i32_1 = arith.constant 0 : i32
    return %arg0, %c0_i32, %c0_i32_0 : i32, i32, i32
  }
  func.func @transform_1(%arg0: i32) -> (i32, i32) {
    %c0_i32 = arith.constant 0 : i32
    %c0_i32_0 = arith.constant 0 : i32
    %c0_i32_1 = arith.constant 0 : i32
    return %c0_i32, %c0_i32_0 : i32, i32
  }
  func.func @transform_2(%arg0: i32) -> (i32, i32) {
    %c0_i32 = arith.constant 0 : i32
    %c0_i32_0 = arith.constant 0 : i32
    %c0_i32_1 = arith.constant 0 : i32
    return %c0_i32, %c0_i32_0 : i32, i32
  }
  func.func @transform_3(%arg0: i32) -> (i32, i32, i32) {
    %c0_i32 = arith.constant 0 : i32
    %c0_i32_0 = arith.constant 0 : i32
    %c0_i32_1 = arith.constant 0 : i32
    return %arg0, %c0_i32, %c0_i32_0 : i32, i32, i32
  }
}

</mosaic_0001>

<llo_original>
// kernel: tpu_custom_call.1
$region0: #{tpu_custom_call.1}
  #allocation0 [shape = 'u32[]', space=smem, size = 0x4, offset = 0x4, fixed_abs, tag = 'smem constant byte address 0x4 - core index']
  #allocation1 [shape = 'u32[144,128]{1,0:T(1,128)}', space=vmem, size = 0x12000, scoped, tag = 'internal scratch']
  %s0 = inlined_call_operand.hbm [shape: f32[2,4,256], index: 0, kind: input, shape index: {}]
  %s1 = inlined_call_operand.vmem [shape: f32[4,2], index: 1, kind: input, shape index: {}]
  %s2 = inlined_call_operand.vmem [shape: f32[2,4], index: 2, kind: input, shape index: {}]
  %s3 = inlined_call_operand.hbm [shape: f32[2,4,256], index: 3, kind: output, shape index: {}]
  %s4 = sld [smem:[#allocation0]]
  $region26: #{tpu_custom_call.1} parent=0
    _
  %s6 = ssub.s32 1, %s4
  %s7 = scalar_select 0, %s6, %s4
  $region1: #{tpu_custom_call.1} parent=0
    #allocation2 [shape = 'u8[8192]{0}', space=vmem, size = 0x2000, scoped, tag = 'input window, operand 0, single buffered']
    #allocation3 [shape = 's32[1]{0}', space=sflag, size = 0x4, scoped, tag = 'scoped memory for tpu_custom_call.1']
    #allocation4 [shape = 's32[1]{0}', space=sflag, size = 0x4, scoped, tag = 'scoped memory for tpu_custom_call.1']
    #allocation5 [shape = 'u8[8192]{0}', space=vmem, size = 0x2000, scoped, tag = 'output window, operand 0, single buffered']
    %8 = vsyncpa [#allocation3], 0
    %9 = vsyncpa [#allocation4], 0
    // Predicated region
    $region2: #{tpu_custom_call.1} parent=1 // pred_check
      _
    $region3: #{tpu_custom_call.1} parent=1 // pred_check_branch
      %11 = sbr.rel (0) target = $region5
    $region4: #{tpu_custom_call.1} parent=1 // pred_region
      %s13 = ssub.s32 256, 256
      %14 = vsyncadd [#allocation3], %s13
      %s15 = sshll.u32 [#allocation2], 4
      %s16 = int_to_ptr.vmem [resolvable:$true] %s15
      %21 = dma.hbm_to_vmem [thread:$0]  %s0, 256, %s16, [#allocation3], 128, 128, 8
    $region5: #{tpu_custom_call.1} parent=1 // pred_fallthru
      _
    // Predicated region
    $region6: #{tpu_custom_call.1} parent=1 // pred_check
      _
    $region7: #{tpu_custom_call.1} parent=1 // pred_check_branch
      %23 = sbr.rel (0) target = $region9
    $region8: #{tpu_custom_call.1} parent=1 // pred_region
      _
    $region9: #{tpu_custom_call.1} parent=1 // pred_fallthru
      _
    // Predicated region
    $region10: #{tpu_custom_call.1} parent=1 // pred_check
      _
    $region11: #{tpu_custom_call.1} parent=1 // pred_check_branch
      %25 = sbr.rel (0) target = $region13
    $region12: #{tpu_custom_call.1} parent=1 // pred_region
      _
    $region13: #{tpu_custom_call.1} parent=1 // pred_fallthru
      _
    // Predicated region
    $region14: #{tpu_custom_call.1} parent=1 // pred_check
      _
    $region15: #{tpu_custom_call.1} parent=1 // pred_check_branch
      %27 = sbr.rel (0) target = $region17
    $region16: #{tpu_custom_call.1} parent=1 // pred_region
      %28 = dma.done [#allocation3], 256
    $region17: #{tpu_custom_call.1} parent=1 // pred_fallthru
      _
    %v29 = vld [vmem:[#allocation2] sm:$0xff]
    %v30 = vld [vmem:[#allocation2 + $0x8] sm:$0xff]
    %v33 = vcombine.high %v29, %v29
    %v34 = vcombine.high %v30, %v30
    %vm37 = vcmask 1043456
    %v38 = vsel %vm37, %v29, 0.0
    %v39 = vsel %vm37, %v33, 0.0
    %v40 = vadd.f32 %v38, %v39
    %41 = vadd.xlane.f32.xlu0 %v40
    %v42 = vpop.xlane.xlu0 %41
    %v43 = vsel %vm37, %v30, 0.0
    %v44 = vsel %vm37, %v34, 0.0
    %v45 = vadd.f32 %v43, %v44
    %46 = vadd.xlane.f32.xlu0 %v45
    %v47 = vpop.xlane.xlu0 %46
    %v48 = vmul.f32 %v42, 0.00390625
    %v49 = vmul.f32 %v47, 0.00390625
    %v50 = vld [vmem:[%s1] sm:$0xf]
    %v53 = vlaneseq
    %v54 = vand.u32 %v53, 127
    %v55 = vlaneseq
    %v56 = vshrl.u32 %v55, 7
    %v57 = vsub.s32 %v54, %v56
    %v58 = vrot.slane %v48, %v57
    %v59 = vlaneseq
    %v60 = vshrl.u32 %v59, 7
    %v61 = vsub.s32 %v54, %v60
    %v62 = vrot.slane %v49, %v61
    %vm63 = vcmask 1041409
    %v64 = vsel %vm63, %v62, %v58
    %vm65 = vcmask 31744
    %v66 = vsel %vm65, %v64, 0
    %v69 = vsel %vm37, %v50, 0
    %71 = vmatprep.subr.mxu0 0.0
    %72 = vmatpush1.msra.mxu0 0.0
    %73 = vmatprep.subr.mxu0 0.0
    %74 = vmatpush1.msra.mxu0 0.0
    %75 = vmatprep.subr.mxu0 0.0
    %76 = vmatpush1.msra.mxu0 0.0
    %77 = vmatprep.subr.mxu0 0.0
    %78 = vmatpush1.msra.mxu0 0.0
    %79 = vmatprep.subr.mxu0 0.0
    %80 = vmatpush1.msra.mxu0 0.0
    %81 = vmatprep.subr.mxu0 0.0
    %82 = vmatpush1.msra.mxu0 0.0
    %83 = vmatprep.subr.mxu0 0.0
    %84 = vmatpush1.msra.mxu0 0.0
    %85 = vmatprep.subr.mxu0 0.0
    %86 = vmatpush1.msra.mxu0 0.0
    %87 = vmatprep.subr.mxu0 0.0
    %88 = vmatpush1.msra.mxu0 0.0
    %89 = vmatprep.subr.mxu0 0.0
    %90 = vmatpush1.msra.mxu0 0.0
    %91 = vmatprep.subr.mxu0 0.0
    %92 = vmatpush1.msra.mxu0 0.0
    %93 = vmatprep.subr.mxu0 0.0
    %94 = vmatpush1.msra.mxu0 0.0
    %95 = vmatprep.subr.mxu0 0.0
    %96 = vmatpush1.msra.mxu0 0.0
    %97 = vmatprep.subr.mxu0 0.0
    %98 = vmatpush1.msra.mxu0 0.0
    %99 = vmatprep.subr.mxu0 0.0
    %100 = vmatpush1.msra.mxu0 0.0
    %101 = vmatprep.subr.mxu0 0.0
    %102 = vmatpush1.msra.mxu0 %v69
    %103 = vmatprep.subr.mxu0 0.0
    %104 = vmatpush2.msra.mxu0 0.0
    %105 = vmatprep.subr.mxu0 0.0
    %106 = vmatpush2.msra.mxu0 0.0
    %107 = vmatprep.subr.mxu0 0.0
    %108 = vmatpush2.msra.mxu0 0.0
    %109 = vmatprep.subr.mxu0 0.0
    %110 = vmatpush2.msra.mxu0 0.0
    %111 = vmatprep.subr.mxu0 0.0
    %112 = vmatpush2.msra.mxu0 0.0
    %113 = vmatprep.subr.mxu0 0.0
    %114 = vmatpush2.msra.mxu0 0.0
    %115 = vmatprep.subr.mxu0 0.0
    %116 = vmatpush2.msra.mxu0 0.0
    %117 = vmatprep.subr.mxu0 0.0
    %118 = vmatpush2.msra.mxu0 0.0
    %119 = vmatprep.subr.mxu0 0.0
    %120 = vmatpush2.msra.mxu0 0.0
    %121 = vmatprep.subr.mxu0 0.0
    %122 = vmatpush2.msra.mxu0 0.0
    %123 = vmatprep.subr.mxu0 0.0
    %124 = vmatpush2.msra.mxu0 0.0
    %125 = vmatprep.subr.mxu0 0.0
    %126 = vmatpush2.msra.mxu0 0.0
    %127 = vmatprep.subr.mxu0 0.0
    %128 = vmatpush2.msra.mxu0 0.0
    %129 = vmatprep.subr.mxu0 0.0
    %130 = vmatpush2.msra.mxu0 0.0
    %131 = vmatprep.subr.mxu0 0.0
    %132 = vmatpush2.msra.mxu0 0.0
    %133 = vmatprep.subr.mxu0 0.0
    %134 = vmatpush2.msra.mxu0 0.0
    %135 = vmatprep.mubr.f32.mxu0 0.0
    %136 = vmatmul.mubr.f32.gmra.mxu0 %v66
    %v137 = vpop.f32.mrf.mxu0
    %v138 = vadd.f32 0.0, %v137
    %v139 = vpop.f32.mrf.mxu0
    %140 = vdwg.mxu0
    %v141 = vmax.f32 %v138, 0.0
    %v142 = vld [vmem:[%s2] sm:$0x3]
    %vm143 = vcmask 15360
    %v145 = vsel %vm143, %v141, 0
    %vm147 = vcmask 1041408
    %v149 = vsel %vm147, %v142, 0
    %151 = vmatprep.subr.mxu0 0.0
    %152 = vmatpush1.msra.mxu0 0.0
    %153 = vmatprep.subr.mxu0 0.0
    %154 = vmatpush1.msra.mxu0 0.0
    %155 = vmatprep.subr.mxu0 0.0
    %156 = vmatpush1.msra.mxu0 0.0
    %157 = vmatprep.subr.mxu0 0.0
    %158 = vmatpush1.msra.mxu0 0.0
    %159 = vmatprep.subr.mxu0 0.0
    %160 = vmatpush1.msra.mxu0 0.0
    %161 = vmatprep.subr.mxu0 0.0
    %162 = vmatpush1.msra.mxu0 0.0
    %163 = vmatprep.subr.mxu0 0.0
    %164 = vmatpush1.msra.mxu0 0.0
    %165 = vmatprep.subr.mxu0 0.0
    %166 = vmatpush1.msra.mxu0 0.0
    %167 = vmatprep.subr.mxu0 0.0
    %168 = vmatpush1.msra.mxu0 0.0
    %169 = vmatprep.subr.mxu0 0.0
    %170 = vmatpush1.msra.mxu0 0.0
    %171 = vmatprep.subr.mxu0 0.0
    %172 = vmatpush1.msra.mxu0 0.0
    %173 = vmatprep.subr.mxu0 0.0
    %174 = vmatpush1.msra.mxu0 0.0
    %175 = vmatprep.subr.mxu0 0.0
    %176 = vmatpush1.msra.mxu0 0.0
    %177 = vmatprep.subr.mxu0 0.0
    %178 = vmatpush1.msra.mxu0 0.0
    %179 = vmatprep.subr.mxu0 0.0
    %180 = vmatpush1.msra.mxu0 0.0
    %181 = vmatprep.subr.mxu0 0.0
    %182 = vmatpush1.msra.mxu0 %v149
    %183 = vmatprep.subr.mxu0 0.0
    %184 = vmatpush2.msra.mxu0 0.0
    %185 = vmatprep.subr.mxu0 0.0
    %186 = vmatpush2.msra.mxu0 0.0
    %187 = vmatprep.subr.mxu0 0.0
    %188 = vmatpush2.msra.mxu0 0.0
    %189 = vmatprep.subr.mxu0 0.0
    %190 = vmatpush2.msra.mxu0 0.0
    %191 = vmatprep.subr.mxu0 0.0
    %192 = vmatpush2.msra.mxu0 0.0
    %193 = vmatprep.subr.mxu0 0.0
    %194 = vmatpush2.msra.mxu0 0.0
    %195 = vmatprep.subr.mxu0 0.0
    %196 = vmatpush2.msra.mxu0 0.0
    %197 = vmatprep.subr.mxu0 0.0
    %198 = vmatpush2.msra.mxu0 0.0
    %199 = vmatprep.subr.mxu0 0.0
    %200 = vmatpush2.msra.mxu0 0.0
    %201 = vmatprep.subr.mxu0 0.0
    %202 = vmatpush2.msra.mxu0 0.0
    %203 = vmatprep.subr.mxu0 0.0
    %204 = vmatpush2.msra.mxu0 0.0
    %205 = vmatprep.subr.mxu0 0.0
    %206 = vmatpush2.msra.mxu0 0.0
    %207 = vmatprep.subr.mxu0 0.0
    %208 = vmatpush2.msra.mxu0 0.0
    %209 = vmatprep.subr.mxu0 0.0
    %210 = vmatpush2.msra.mxu0 0.0
    %211 = vmatprep.subr.mxu0 0.0
    %212 = vmatpush2.msra.mxu0 0.0
    %213 = vmatprep.subr.mxu0 0.0
    %214 = vmatpush2.msra.mxu0 0.0
    %215 = vmatprep.mubr.f32.mxu0 0.0
    %216 = vmatmul.mubr.f32.gmra.mxu0 %v145
    %v217 = vpop.f32.mrf.mxu0
    %v218 = vadd.f32 0.0, %v217
    %v219 = vpop.f32.mrf.mxu0
    %220 = vdwg.mxu0
    %v221 = vxor.u32 %v218, 2147483648
    %v222 = vmul.f32 %v221, 1.442695
    %v223 = vpow.pop %v222
    %v224 = vadd.f32 %v223, 1.0
    %v225 = vrcp.pop %v224
    %v226 = vmul.f32 1.0, %v225
    %v227 = vlaneseq
    %v228 = vshrl.u32 %v227, 7
    %v229 = vsub.s32 0, %v228
    %v230 = vrot.slane %v226, %v229
    %232 = vbcast.lane.b32.xlu0 %v230, 256
    %v233 = vpop.permute.xlu0 %232
    %v234 = vlaneseq
    %v235 = vshrl.u32 %v234, 7
    %v236 = vsub.s32 1, %v235
    %v237 = vrot.slane %v226, %v236
    %239 = vbcast.lane.b32.xlu0 %v237, 256
    %v240 = vpop.permute.xlu0 %239
    %v244 = vunpack.c.l.s4 839922192
    %v245 = vunpack.c.0.s8 %v244
    %v246 = vlaneseq
    %v247 = vshrl.u32 %v246, 7
    %v248 = vsub.s32 %v245, %v247
    %v249 = vrot.slane %v233, %v248
    %v251 = vunpack.c.l.s4 839922192
    %v252 = vunpack.c.0.s8 %v251
    %v253 = vlaneseq
    %v254 = vshrl.u32 %v253, 7
    %v255 = vsub.s32 %v252, %v254
    %v256 = vrot.slane %v240, %v255
    %v259 = vmul.f32 %v29, %v249
    %v260 = vmul.f32 %v30, %v256
    %261 = vst [vmem:[#allocation5] sm:$0xff] %v259
    %262 = vst [vmem:[#allocation5 + $0x8] sm:$0xff] %v260
    // Predicated region
    $region18: #{tpu_custom_call.1} parent=1 // pred_check
      _
    $region19: #{tpu_custom_call.1} parent=1 // pred_check_branch
      %264 = sbr.rel (0) target = $region21
    $region20: #{tpu_custom_call.1} parent=1 // pred_region
      %s266 = ssub.s32 256, 256
      %267 = vsyncadd [#allocation4], %s266
      %s268 = sshll.u32 [#allocation5], 4
      %s269 = int_to_ptr.vmem [resolvable:$true] %s268
      %274 = dma.vmem_to_hbm [thread:$0]  %s269, 256, %s3, [#allocation4], 128, 128, 8
    $region21: #{tpu_custom_call.1} parent=1 // pred_fallthru
      _
    // Predicated region
    $region22: #{tpu_custom_call.1} parent=1 // pred_check
      _
    $region23: #{tpu_custom_call.1} parent=1 // pred_check_branch
      %276 = sbr.rel (0) target = $region25
    $region24: #{tpu_custom_call.1} parent=1 // pred_region
      %277 = dma.done [#allocation4], 256
    $region25: #{tpu_custom_call.1} parent=1 // pred_fallthru
      _
    %278 = vsyncpa [#allocation3], 1
    %279 = vsyncpa [#allocation4], 1

</llo_original>
